<compile_context>
chip_gen: v5e
topology: v5e:2x2
jax: 0.10.0
libtpu: 0.0.40
codegen_flags: <defaults>
</compile_context>

<pallas_src>
import functools

import jax
import jax.numpy as jnp
from jax import lax
from jax.experimental import pallas as pl
from jax.experimental.pallas import tpu as pltpu


def _round_up(x, m):
    return (x + m - 1) // m * m


def _cdiv(a, b):
    return (a + b - 1) // b


def _vmem_capacity_bytes():
    """Physical VMEM per TensorCore; conservative 64 MiB fallback (v7x)."""
    try:
        cap = int(pltpu.get_tpu_info().vmem_capacity_bytes)
        if cap > 0:
            return cap
    except Exception:
        pass
    return 64 * 1024 * 1024


_INV_SQRT2 = 0.7071067811865476


def _gelu_exact(h):
    # Exact erf-based GELU (nn.GELU default), evaluated in f32.
    return 0.5 * h * (1.0 + lax.erf(h * _INV_SQRT2))


# --------------------------------------------------------------------------
# Kernels
# --------------------------------------------------------------------------
def _ffn_resident_kernel(x_ref, w1_ref, b1_ref, w2_ref, b2_ref, o_ref):
    # h = x @ W1 + b1 : bf16 operands, f32 accumulation on the MXU.
    h = jnp.dot(x_ref[...], w1_ref[...], preferred_element_type=jnp.float32)
    h = h + b1_ref[...]
    # dropout_1: identity (inference).
    h = _gelu_exact(h)
    # out = gelu(h) @ W2 + b2 : cast activation to bf16 for full MXU rate.
    out = jnp.dot(h.astype(jnp.bfloat16), w2_ref[...],
                  preferred_element_type=jnp.float32)
    # dropout_2: identity (inference).
    o_ref[...] = (out + b2_ref[...]).astype(o_ref.dtype)


def _ffn_hidden_tiled_kernel(x_ref, w1_ref, b1_ref, w2_ref, b2_ref, o_ref,
                             acc_ref):
    k = pl.program_id(1)

    @pl.when(k == 0)
    def _():
        acc_ref[...] = jnp.zeros_like(acc_ref)

    # Hidden slice of the first matmul + bias + GELU (elementwise over hidden,
    # so slicing along hidden is exact).  Zero-padded ragged hidden chunks
    # contribute exactly nothing: gelu(0 + 0) @ 0 == 0.
    h = jnp.dot(x_ref[...], w1_ref[...], preferred_element_type=jnp.float32)
    h = h + b1_ref[...]
    h = _gelu_exact(h)
    acc_ref[...] += jnp.dot(h.astype(jnp.bfloat16), w2_ref[...],
                            preferred_element_type=jnp.float32)

    @pl.when(k == pl.num_programs(1) - 1)
    def _():
        o_ref[...] = (acc_ref[...] + b2_ref[...]).astype(o_ref.dtype)


# --------------------------------------------------------------------------
# Spec / VMEM helpers
# --------------------------------------------------------------------------
def _const_spec(block_shape, index_map, single_buffer):
    """BlockSpec for an operand whose block index never changes."""
    if single_buffer:
        return pl.BlockSpec(block_shape, index_map,
                            pipeline_mode=pl.Buffered(1))
    return pl.BlockSpec(block_shape, index_map)


def _resident_vmem_need(in_dim, hidden, dim, tile_n, out_size):
    w = 2 * (in_dim * hidden + hidden * dim)   # bf16 weights, single buffer
    b = 4 * (hidden + dim)                     # f32 biases, single buffer
    x = 2 * tile_n * in_dim * 2                # bf16 x tile, double buffered
    o = 2 * tile_n * dim * out_size            # out tile, double buffered
    h = tile_n * hidden * (4 + 2)              # f32 h + bf16 cast (scratch)
    return w + b + x + o + h


def _hidden_tiled_vmem_need(in_dim, hidden, dim, tile_n, tile_h, out_size):
    w = 2 * 2 * (in_dim * tile_h + tile_h * dim)   # bf16 weight slices, 2 bufs
    b = 2 * 4 * tile_h + 4 * dim                   # b1 slices (2 bufs) + b2
    x = 2 * tile_n * in_dim * 2
    o = 2 * tile_n * dim * out_size
    acc = tile_n * dim * 4
    h = tile_n * tile_h * (4 + 2)
    return w + b + x + o + acc + h


# --------------------------------------------------------------------------
# pallas_call builders
# --------------------------------------------------------------------------
def _build_resident_call(N, in_dim, hidden, dim, tile_n, out_dtype,
                         vmem_limit, single_buffer_weights):
    grid_rows = _cdiv(N, tile_n)
    out_size = jnp.dtype(out_dtype).itemsize
    cost = pl.CostEstimate(
        flops=2 * N * (in_dim * hidden + hidden * dim),
        transcendentals=N * hidden,
        bytes_accessed=(N * in_dim * 2
                        + 2 * (in_dim * hidden + hidden * dim)
                        + 4 * (hidden + dim)
                        + N * dim * out_size))
    return pl.pallas_call(
        _ffn_resident_kernel,
        out_shape=jax.ShapeDtypeStruct((N, dim), out_dtype),
        grid_spec=pltpu.PrefetchScalarGridSpec(
            num_scalar_prefetch=0,
            grid=(grid_rows,),
            in_specs=[
                pl.BlockSpec((tile_n, in_dim), lambda i: (i, 0)),    # x tile
                _const_spec((in_dim, hidden), lambda i: (0, 0),
                            single_buffer_weights),                  # W1
                _const_spec((1, hidden), lambda i: (0, 0),
                            single_buffer_weights),                  # b1
                _const_spec((hidden, dim), lambda i: (0, 0),
                            single_buffer_weights),                  # W2
                _const_spec((1, dim), lambda i: (0, 0),
                            single_buffer_weights),                  # b2
            ],
            out_specs=pl.BlockSpec((tile_n, dim), lambda i: (i, 0)),
        ),
        compiler_params=pltpu.CompilerParams(
            dimension_semantics=("parallel",),
            vmem_limit_bytes=vmem_limit),
        cost_estimate=cost,
    )


def _build_hidden_tiled_call(N, in_dim, hidden, dim, tile_n, tile_h, out_dtype,
                             vmem_limit, single_buffer_weights):
    grid = (_cdiv(N, tile_n), _cdiv(hidden, tile_h))
    out_size = jnp.dtype(out_dtype).itemsize
    cost = pl.CostEstimate(
        flops=2 * N * (in_dim * hidden + hidden * dim),
        transcendentals=N * hidden,
        bytes_accessed=(N * in_dim * 2
                        + grid[0] * 2 * (in_dim * hidden + hidden * dim)
                        + 4 * (hidden + dim)
                        + N * dim * out_size))
    return pl.pallas_call(
        _ffn_hidden_tiled_kernel,
        out_shape=jax.ShapeDtypeStruct((N, dim), out_dtype),
        grid_spec=pltpu.PrefetchScalarGridSpec(
            num_scalar_prefetch=0,
            grid=grid,
            in_specs=[
                pl.BlockSpec((tile_n, in_dim), lambda i, k: (i, 0)),  # x tile
                pl.BlockSpec((in_dim, tile_h), lambda i, k: (0, k)),  # W1 slice
                pl.BlockSpec((1, tile_h), lambda i, k: (0, k)),       # b1 slice
                pl.BlockSpec((tile_h, dim), lambda i, k: (k, 0)),     # W2 slice
                _const_spec((1, dim), lambda i, k: (0, 0),
                            single_buffer_weights),                   # b2
            ],
            out_specs=pl.BlockSpec((tile_n, dim), lambda i, k: (i, 0)),
            scratch_shapes=[pltpu.VMEM((tile_n, dim), jnp.float32)],
        ),
        compiler_params=pltpu.CompilerParams(
            dimension_semantics=("parallel", "arbitrary"),
            vmem_limit_bytes=vmem_limit),
        cost_estimate=cost,
    )


# --------------------------------------------------------------------------
# Public wrapper
# --------------------------------------------------------------------------
def feed_forward(x, w1, b1, w2, b2, *, tile_n=512, hidden_tile=None,
                 out_dtype=None):
    """gelu(x @ w1 + b1) @ w2 + b2 with dropout = identity (inference).

    x: [..., in_dim]; w1: [in_dim, hidden]; b1: [hidden] or [1, hidden];
    w2: [hidden, dim]; b2: [dim] or [1, dim].  Returns [..., dim].
    """
    in_dim = x.shape[-1]
    hidden = w1.shape[1]
    dim = w2.shape[1]
    lead = x.shape[:-1]
    N = 1
    for s in lead:
        N *= int(s)
    out_dtype = x.dtype if out_dtype is None else jnp.dtype(out_dtype)
    out_size = jnp.dtype(out_dtype).itemsize

    # bf16 MXU operands; biases stay f32 (f32 accumulation inside the kernel).
    x2 = x.reshape(N, in_dim).astype(jnp.bfloat16)
    w1_bf = w1.astype(jnp.bfloat16)
    w2_bf = w2.astype(jnp.bfloat16)
    b1_f = b1.reshape(1, hidden).astype(jnp.float32)
    b2_f = b2.reshape(1, dim).astype(jnp.float32)

    # Row tile: multiple of 16 (bf16 packs 16 rows per vreg); default 512.
    tile_n = max(16, _round_up(min(int(tile_n), N), 16))
    # Keep >= 2 grid steps when there is enough work so the "parallel" row
    # axis can actually shard across v7x's two TensorCores.
    if _cdiv(N, tile_n) < 2 and N > 256:
        tile_n = max(16, _round_up(_cdiv(N, 2), 16))

    cap = int(0.85 * _vmem_capacity_bytes())
    args = (x2, w1_bf, b1_f, w2_bf, b2_f)

    resident_need = _resident_vmem_need(in_dim, hidden, dim, tile_n, out_size)
    if hidden_tile is None and resident_need <= cap:
        vmem_limit = min(max(int(1.25 * resident_need) + (4 << 20), 16 << 20),
                         cap)
        build = functools.partial(_build_resident_call, N, in_dim, hidden, dim,
                                  tile_n, out_dtype, vmem_limit)
    else:
        if hidden_tile is not None:
            tile_h = int(hidden_tile)
        else:
            tile_h = min(hidden, 4096)
            if hidden >= 128:
                tile_h = _round_up(tile_h, 128)
            while (tile_h > 128 and _hidden_tiled_vmem_need(
                    in_dim, hidden, dim, tile_n, tile_h, out_size) > cap):
                tile_h = max(128, _round_up(tile_h // 2, 128))
        need = _hidden_tiled_vmem_need(in_dim, hidden, dim, tile_n, tile_h,
                                       out_size)
        vmem_limit = min(max(int(1.25 * need) + (4 << 20), 16 << 20), cap)
        build = functools.partial(_build_hidden_tiled_call, N, in_dim, hidden,
                                  dim, tile_n, tile_h, out_dtype, vmem_limit)

    try:
        out = build(single_buffer_weights=True)(*args)
    except Exception:
        # Fallback for Pallas builds that reject pipeline_mode=pl.Buffered(1).
        out = build(single_buffer_weights=False)(*args)

    return out.reshape(*lead, dim)


# --------------------------------------------------------------------------
# References
# --------------------------------------------------------------------------
def reference_f32(x, w1, b1, w2, b2):
    """Exact f32 forward of the module (dropout = identity)."""
    h = jnp.dot(x, w1) + b1.reshape(1, -1)
    h = _gelu_exact(h)
    return jnp.dot(h, w2) + b2.reshape(1, -1)


def reference_bf16(x, w1, b1, w2, b2):
    """Reference mirroring the kernel numerics (bf16 operands, f32 acc)."""
    h = jnp.dot(x.astype(jnp.bfloat16), w1.astype(jnp.bfloat16),
                preferred_element_type=jnp.float32) + b1.reshape(1, -1)
    h = _gelu_exact(h)
    return jnp.dot(h.astype(jnp.bfloat16), w2.astype(jnp.bfloat16),
                   preferred_element_type=jnp.float32) + b2.reshape(1, -1)


if __name__ == "__main__":
    # Module hyperparameters (small, MXU-friendly).
    dim = 128
    hidden_dim_multiplier = 2
    input_dim_multiplier = 1
    # dropout p is realized only as identity (inference / eval mode).

    input_dim = int(dim * input_dim_multiplier)
    hidden_dim = int(dim * hidden_dim_multiplier)
    batch, seq = 2, 8

    key = jax.random.PRNGKey(0)
    k_x, k_w1, k_b1, k_w2, k_b2, k_xr = jax.random.split(key, 6)

    x = jax.random.normal(k_x, (batch, seq, input_dim), dtype=jnp.float32)
    # nn.Linear-style init (uniform in +-1/sqrt(fan_in)), deterministic.
    w1 = jax.random.uniform(k_w1, (input_dim, hidden_dim), jnp.float32,
                            -1.0 / input_dim ** 0.5, 1.0 / input_dim ** 0.5)
    b1 = jax.random.uniform(k_b1, (hidden_dim,), jnp.float32,
                            -1.0 / input_dim ** 0.5, 1.0 / input_dim ** 0.5)
    w2 = jax.random.uniform(k_w2, (hidden_dim, dim), jnp.float32,
                            -1.0 / hidden_dim ** 0.5, 1.0 / hidden_dim ** 0.5)
    b2 = jax.random.uniform(k_b2, (dim,), jnp.float32,
                            -1.0 / hidden_dim ** 0.5, 1.0 / hidden_dim ** 0.5)

    ref_bf = reference_bf16(x, w1, b1, w2, b2)
    ref_f32 = reference_f32(x, w1, b1, w2, b2)

    # 1) Default (resident-weights) path.
    out = jax.block_until_ready(feed_forward(x, w1, b1, w2, b2))
    assert out.shape == (batch, seq, dim)
    assert jnp.allclose(out, ref_bf, atol=2e-3, rtol=2e-3), \
        "resident path mismatch vs bf16-mirrored reference"
    assert jnp.allclose(out, ref_f32, atol=5e-2, rtol=5e-2), \
        "resident path mismatch vs f32 reference"

    # 2) Hidden-tiled (reduction) path, forced with a small hidden tile.
    out_h = jax.block_until_ready(
        feed_forward(x, w1, b1, w2, b2, hidden_tile=128))
    assert jnp.allclose(out_h, ref_bf, atol=2e-3, rtol=2e-3), \
        "hidden-tiled path mismatch vs bf16-mirrored reference"

    # 3) Ragged last row tile (no wrapper pad: Pallas masks the partial block).
    n_rag = 24
    x_rag = jax.random.normal(k_xr, (n_rag, input_dim), dtype=jnp.float32)
    out_rag = jax.block_until_ready(
        feed_forward(x_rag, w1, b1, w2, b2, tile_n=16))
    assert out_rag.shape == (n_rag, dim)
    assert jnp.allclose(out_rag, reference_bf16(x_rag, w1, b1, w2, b2),
                        atol=2e-3, rtol=2e-3), \
        "ragged-row path mismatch vs bf16-mirrored reference"

    print("KERNEL_OK")
</pallas_src>

<mosaic_0001>
module attributes {stable_mosaic.version = 11 : i64} {
  func.func @_ffn_resident_kernel(%arg0: i32, %arg1: memref<16x128xbf16, #tpu.memory_space<vmem>>, %arg2: memref<128x256xbf16, #tpu.memory_space<vmem>>, %arg3: memref<1x256xf32, #tpu.memory_space<vmem>>, %arg4: memref<256x128xbf16, #tpu.memory_space<vmem>>, %arg5: memref<1x128xf32, #tpu.memory_space<vmem>>, %arg6: memref<16x128xf32, #tpu.memory_space<vmem>>) attributes {dimension_semantics = [#tpu.dimension_semantics<parallel>], iteration_bounds = array<i64: 1>, scalar_prefetch = 0 : i64, scratch_operands = 0 : i64, tpu.core_type = #tpu.core_type<tc>, window_params = [{transform_indices = @transform_0, window_bounds = array<i64: 16, 128>}, {pipeline_mode = #tpu.pipeline_mode<synchronous>, transform_indices = @transform_1, window_bounds = array<i64: 128, 256>}, {pipeline_mode = #tpu.pipeline_mode<synchronous>, transform_indices = @transform_2, window_bounds = array<i64: 1, 256>}, {pipeline_mode = #tpu.pipeline_mode<synchronous>, transform_indices = @transform_3, window_bounds = array<i64: 256, 128>}, {pipeline_mode = #tpu.pipeline_mode<synchronous>, transform_indices = @transform_4, window_bounds = array<i64: 1, 128>}, {transform_indices = @transform_5, window_bounds = array<i64: 16, 128>}]} {
    %c0 = arith.constant 0 : index
    %c0_0 = arith.constant 0 : index
    %0 = vector.load %arg1[%c0, %c0_0] : memref<16x128xbf16, #tpu.memory_space<vmem>>, vector<16x128xbf16>
    %c0_1 = arith.constant 0 : index
    %c0_2 = arith.constant 0 : index
    %1 = vector.load %arg2[%c0_1, %c0_2] : memref<128x256xbf16, #tpu.memory_space<vmem>>, vector<128x256xbf16>
    %cst = arith.constant dense<0.000000e+00> : vector<16x256xf32>
    %2 = tpu.matmul %0, %1, %cst {dimension_numbers = #tpu.dot_dimension_numbers<[1], [0], [0], [1], [0, 0, 1, 1], [], []>} : vector<16x128xbf16>, vector<128x256xbf16>, vector<16x256xf32> -> vector<16x256xf32>
    %c0_3 = arith.constant 0 : index
    %c0_4 = arith.constant 0 : index
    %3 = vector.load %arg3[%c0_3, %c0_4] : memref<1x256xf32, #tpu.memory_space<vmem>>, vector<1x256xf32>
    %4 = vector.broadcast %3 : vector<1x256xf32> to vector<16x256xf32>
    %5 = arith.addf %2, %4 : vector<16x256xf32>
    %cst_5 = arith.constant 5.000000e-01 : f32
    %6 = vector.broadcast %cst_5 : f32 to vector<16x256xf32>
    %7 = arith.mulf %6, %5 : vector<16x256xf32>
    %cst_6 = arith.constant 0.707106769 : f32
    %8 = vector.broadcast %cst_6 : f32 to vector<16x256xf32>
    %9 = arith.mulf %5, %8 : vector<16x256xf32>
    %10 = math.erf %9 : vector<16x256xf32>
    %cst_7 = arith.constant 1.000000e+00 : f32
    %11 = vector.broadcast %cst_7 : f32 to vector<16x256xf32>
    %12 = arith.addf %11, %10 : vector<16x256xf32>
    %13 = arith.mulf %7, %12 : vector<16x256xf32>
    %14 = arith.truncf %13 : vector<16x256xf32> to vector<16x256xbf16>
    %c0_8 = arith.constant 0 : index
    %c0_9 = arith.constant 0 : index
    %15 = vector.load %arg4[%c0_8, %c0_9] : memref<256x128xbf16, #tpu.memory_space<vmem>>, vector<256x128xbf16>
    %cst_10 = arith.constant dense<0.000000e+00> : vector<16x128xf32>
    %16 = tpu.matmul %14, %15, %cst_10 {dimension_numbers = #tpu.dot_dimension_numbers<[1], [0], [0], [1], [0, 0, 1, 1], [], []>} : vector<16x256xbf16>, vector<256x128xbf16>, vector<16x128xf32> -> vector<16x128xf32>
    %c0_11 = arith.constant 0 : index
    %c0_12 = arith.constant 0 : index
    %17 = vector.load %arg5[%c0_11, %c0_12] : memref<1x128xf32, #tpu.memory_space<vmem>>, vector<1x128xf32>
    %18 = vector.broadcast %17 : vector<1x128xf32> to vector<16x128xf32>
    %19 = arith.addf %16, %18 : vector<16x128xf32>
    %c0_13 = arith.constant 0 : index
    %c0_14 = arith.constant 0 : index
    %20 = vector.load %arg6[%c0_13, %c0_14] : memref<16x128xf32, #tpu.memory_space<vmem>>, vector<16x128xf32>
    tpu.vector_store %arg6[%c0_13, %c0_14], %19 {strides = array<i32>} : memref<16x128xf32, #tpu.memory_space<vmem>>, vector<16x128xf32>,
    return
  }
  func.func @transform_0(%arg0: i32) -> (i32, i32) {
    %c0_i32 = arith.constant 0 : i32
    %c0_i32_0 = arith.constant 0 : i32
    return %arg0, %c0_i32 : i32, i32
  }
  func.func @transform_1(%arg0: i32) -> (i32, i32) {
    %c0_i32 = arith.constant 0 : i32
    %c0_i32_0 = arith.constant 0 : i32
    %c0_i32_1 = arith.constant 0 : i32
    return %c0_i32, %c0_i32_0 : i32, i32
  }
  func.func @transform_2(%arg0: i32) -> (i32, i32) {
    %c0_i32 = arith.constant 0 : i32
    %c0_i32_0 = arith.constant 0 : i32
    %c0_i32_1 = arith.constant 0 : i32
    return %c0_i32, %c0_i32_0 : i32, i32
  }
  func.func @transform_3(%arg0: i32) -> (i32, i32) {
    %c0_i32 = arith.constant 0 : i32
    %c0_i32_0 = arith.constant 0 : i32
    %c0_i32_1 = arith.constant 0 : i32
    return %c0_i32, %c0_i32_0 : i32, i32
  }
  func.func @transform_4(%arg0: i32) -> (i32, i32) {
    %c0_i32 = arith.constant 0 : i32
    %c0_i32_0 = arith.constant 0 : i32
    %c0_i32_1 = arith.constant 0 : i32
    return %c0_i32, %c0_i32_0 : i32, i32
  }
  func.func @transform_5(%arg0: i32) -> (i32, i32) {
    %c0_i32 = arith.constant 0 : i32
    %c0_i32_0 = arith.constant 0 : i32
    return %arg0, %c0_i32 : i32, i32
  }
}

module attributes {stable_mosaic.version = 11 : i64} {
  func.func @_ffn_resident_kernel(%arg0: i32, %arg1: memref<16x128xbf16, #tpu.memory_space<vmem>>, %arg2: memref<128x256xbf16, #tpu.memory_space<vmem>>, %arg3: memref<1x256xf32, #tpu.memory_space<vmem>>, %arg4: memref<256x128xbf16, #tpu.memory_space<vmem>>, %arg5: memref<1x128xf32, #tpu.memory_space<vmem>>, %arg6: memref<16x128xf32, #tpu.memory_space<vmem>>) attributes {dimension_semantics = [#tpu.dimension_semantics<parallel>], iteration_bounds = array<i64: 1>, scalar_prefetch = 0 : i64, scratch_operands = 0 : i64, tpu.core_type = #tpu.core_type<tc>, window_params = [{transform_indices = @transform_0, window_bounds = array<i64: 16, 128>}, {pipeline_mode = #tpu.pipeline_mode<synchronous>, transform_indices = @transform_1, window_bounds = array<i64: 128, 256>}, {pipeline_mode = #tpu.pipeline_mode<synchronous>, transform_indices = @transform_2, window_bounds = array<i64: 1, 256>}, {pipeline_mode = #tpu.pipeline_mode<synchronous>, transform_indices = @transform_3, window_bounds = array<i64: 256, 128>}, {pipeline_mode = #tpu.pipeline_mode<synchronous>, transform_indices = @transform_4, window_bounds = array<i64: 1, 128>}, {transform_indices = @transform_5, window_bounds = array<i64: 16, 128>}]} {
    %c0 = arith.constant 0 : index
    %c0_0 = arith.constant 0 : index
    %0 = vector.load %arg1[%c0, %c0_0] : memref<16x128xbf16, #tpu.memory_space<vmem>>, vector<16x128xbf16>
    %c0_1 = arith.constant 0 : index
    %c0_2 = arith.constant 0 : index
    %1 = vector.load %arg2[%c0_1, %c0_2] : memref<128x256xbf16, #tpu.memory_space<vmem>>, vector<128x256xbf16>
    %cst = arith.constant dense<0.000000e+00> : vector<16x256xf32>
    %2 = tpu.matmul %0, %1, %cst {dimension_numbers = #tpu.dot_dimension_numbers<[1], [0], [0], [1], [0, 0, 1, 1], [], []>} : vector<16x128xbf16>, vector<128x256xbf16>, vector<16x256xf32> -> vector<16x256xf32>
    %c0_3 = arith.constant 0 : index
    %c0_4 = arith.constant 0 : index
    %3 = vector.load %arg3[%c0_3, %c0_4] : memref<1x256xf32, #tpu.memory_space<vmem>>, vector<1x256xf32>
    %4 = vector.broadcast %3 : vector<1x256xf32> to vector<16x256xf32>
    %5 = arith.addf %2, %4 : vector<16x256xf32>
    %cst_5 = arith.constant 5.000000e-01 : f32
    %6 = vector.broadcast %cst_5 : f32 to vector<16x256xf32>
    %7 = arith.mulf %6, %5 : vector<16x256xf32>
    %cst_6 = arith.constant 0.707106769 : f32
    %8 = vector.broadcast %cst_6 : f32 to vector<16x256xf32>
    %9 = arith.mulf %5, %8 : vector<16x256xf32>
    %10 = math.erf %9 : vector<16x256xf32>
    %cst_7 = arith.constant 1.000000e+00 : f32
    %11 = vector.broadcast %cst_7 : f32 to vector<16x256xf32>
    %12 = arith.addf %11, %10 : vector<16x256xf32>
    %13 = arith.mulf %7, %12 : vector<16x256xf32>
    %14 = arith.truncf %13 : vector<16x256xf32> to vector<16x256xbf16>
    %c0_8 = arith.constant 0 : index
    %c0_9 = arith.constant 0 : index
    %15 = vector.load %arg4[%c0_8, %c0_9] : memref<256x128xbf16, #tpu.memory_space<vmem>>, vector<256x128xbf16>
    %cst_10 = arith.constant dense<0.000000e+00> : vector<16x128xf32>
    %16 = tpu.matmul %14, %15, %cst_10 {dimension_numbers = #tpu.dot_dimension_numbers<[1], [0], [0], [1], [0, 0, 1, 1], [], []>} : vector<16x256xbf16>, vector<256x128xbf16>, vector<16x128xf32> -> vector<16x128xf32>
    %c0_11 = arith.constant 0 : index
    %c0_12 = arith.constant 0 : index
    %17 = vector.load %arg5[%c0_11, %c0_12] : memref<1x128xf32, #tpu.memory_space<vmem>>, vector<1x128xf32>
    %18 = vector.broadcast %17 : vector<1x128xf32> to vector<16x128xf32>
    %19 = arith.addf %16, %18 : vector<16x128xf32>
    %c0_13 = arith.constant 0 : index
    %c0_14 = arith.constant 0 : index
    %20 = vector.load %arg6[%c0_13, %c0_14] : memref<16x128xf32, #tpu.memory_space<vmem>>, vector<16x128xf32>
    tpu.vector_store %arg6[%c0_13, %c0_14], %19 {strides = array<i32>} : memref<16x128xf32, #tpu.memory_space<vmem>>, vector<16x128xf32>,
    return
  }
  func.func @transform_0(%arg0: i32) -> (i32, i32) {
    %c0_i32 = arith.constant 0 : i32
    %c0_i32_0 = arith.constant 0 : i32
    return %arg0, %c0_i32 : i32, i32
  }
  func.func @transform_1(%arg0: i32) -> (i32, i32) {
    %c0_i32 = arith.constant 0 : i32
    %c0_i32_0 = arith.constant 0 : i32
    %c0_i32_1 = arith.constant 0 : i32
    return %c0_i32, %c0_i32_0 : i32, i32
  }
  func.func @transform_2(%arg0: i32) -> (i32, i32) {
    %c0_i32 = arith.constant 0 : i32
    %c0_i32_0 = arith.constant 0 : i32
    %c0_i32_1 = arith.constant 0 : i32
    return %c0_i32, %c0_i32_0 : i32, i32
  }
  func.func @transform_3(%arg0: i32) -> (i32, i32) {
    %c0_i32 = arith.constant 0 : i32
    %c0_i32_0 = arith.constant 0 : i32
    %c0_i32_1 = arith.constant 0 : i32
    return %c0_i32, %c0_i32_0 : i32, i32
  }
  func.func @transform_4(%arg0: i32) -> (i32, i32) {
    %c0_i32 = arith.constant 0 : i32
    %c0_i32_0 = arith.constant 0 : i32
    %c0_i32_1 = arith.constant 0 : i32
    return %c0_i32, %c0_i32_0 : i32, i32
  }
  func.func @transform_5(%arg0: i32) -> (i32, i32) {
    %c0_i32 = arith.constant 0 : i32
    %c0_i32_0 = arith.constant 0 : i32
    return %arg0, %c0_i32 : i32, i32
  }
}

</mosaic_0001>

<llo_original>
// kernel: tpu_custom_call.1
$region0: #{tpu_custom_call.1}
  #allocation0 [shape = 'u32[]', space=smem, size = 0x4, offset = 0x4, fixed_abs, tag = 'smem constant byte address 0x4 - core index']
  #allocation1 [shape = 'u32[72,128]{1,0:T(1,128)}', space=vmem, size = 0x9000, scoped, tag = 'internal scratch']
  %s0 = inlined_call_operand.hbm [shape: bf16[16,128], index: 0, kind: input, shape index: {}]
  %s1 = inlined_call_operand.hbm [shape: bf16[128,256], index: 1, kind: input, shape index: {}]
  %s2 = inlined_call_operand.hbm [shape: f32[1,256], index: 2, kind: input, shape index: {}]
  %s3 = inlined_call_operand.hbm [shape: bf16[256,128], index: 3, kind: input, shape index: {}]
  %s4 = inlined_call_operand.vmem [shape: f32[1,128], index: 4, kind: input, shape index: {}]
  %s5 = inlined_call_operand.hbm [shape: f32[16,128], index: 5, kind: output, shape index: {}]
  %s6 = sld [smem:[#allocation0]]
  $region46: #{tpu_custom_call.1} parent=0
    _
  %s8 = ssub.s32 1, %s6
  %s9 = scalar_select 0, %s8, %s6
  $region1: #{tpu_custom_call.1} parent=0
    #allocation2 [shape = 'u8[4096]{0}', space=vmem, size = 0x1000, scoped, tag = 'input window, operand 0, single buffered']
    #allocation3 [shape = 's32[1]{0}', space=sflag, size = 0x4, scoped, tag = 'scoped memory for tpu_custom_call.1']
    #allocation4 [shape = 's32[1]{0}', space=sflag, size = 0x4, scoped, tag = 'scoped memory for tpu_custom_call.1']
    #allocation5 [shape = 'u8[65536]{0}', space=vmem, size = 0x10000, scoped, tag = 'input window, operand 1, single buffered']
    #allocation6 [shape = 's32[1]{0}', space=sflag, size = 0x4, scoped, tag = 'scoped memory for tpu_custom_call.1']
    #allocation7 [shape = 'u8[1024]{0}', space=vmem, size = 0x400, scoped, tag = 'input window, operand 2, single buffered']
    #allocation8 [shape = 'u8[65536]{0}', space=vmem, size = 0x10000, scoped, tag = 'input window, operand 3, single buffered']
    #allocation9 [shape = 's32[1]{0}', space=sflag, size = 0x4, scoped, tag = 'scoped memory for tpu_custom_call.1']
    #allocation10 [shape = 'u8[8192]{0}', space=vmem, size = 0x2000, scoped, tag = 'output window, operand 0, single buffered']
    %10 = vsyncpa [#allocation3], 0
    %11 = vsyncpa [#allocation6], 0
    %12 = vsyncpa [#allocation9], 0
    %13 = vsyncpa [#allocation4], 0
    // Predicated region
    $region2: #{tpu_custom_call.1} parent=1 // pred_check
      _
    $region3: #{tpu_custom_call.1} parent=1 // pred_check_branch
      %15 = sbr.rel (0) target = $region5
    $region4: #{tpu_custom_call.1} parent=1 // pred_region
      %17 = vsyncadd [#allocation3], 0
      %s18 = sshll.u32 %s0, 4
      %s19 = int_to_ptr.hbm [resolvable:$true] %s18
      %s20 = sshll.u32 [#allocation2], 4
      %s21 = int_to_ptr.vmem [resolvable:$true] %s20
      %26 = dma.hbm_to_vmem [thread:$0]  %s19, 128, %s21, [#allocation3], 64, 64, 4
    $region5: #{tpu_custom_call.1} parent=1 // pred_fallthru
      _
    // Predicated region
    $region6: #{tpu_custom_call.1} parent=1 // pred_check
      _
    $region7: #{tpu_custom_call.1} parent=1 // pred_check_branch
      %28 = sbr.rel (0) target = $region9
    $region8: #{tpu_custom_call.1} parent=1 // pred_region
      %30 = vsyncadd [#allocation6], 0
      %s31 = sshll.u32 %s1, 4
      %s32 = int_to_ptr.hbm [resolvable:$true] %s31
      %s33 = sshll.u32 [#allocation5], 4
      %s34 = int_to_ptr.vmem [resolvable:$true] %s33
      %39 = dma.hbm_to_vmem [thread:$0]  %s32, 2048, %s34, [#allocation6], 128, 128, 8
    $region9: #{tpu_custom_call.1} parent=1 // pred_fallthru
      _
    // Predicated region
    $region10: #{tpu_custom_call.1} parent=1 // pred_check
      _
    $region11: #{tpu_custom_call.1} parent=1 // pred_check_branch
      %41 = sbr.rel (0) target = $region13
    $region12: #{tpu_custom_call.1} parent=1 // pred_region
      %43 = vsyncadd [#allocation6], 0
      %s45 = sshll.u32 %s2, 4
      %s46 = int_to_ptr.hbm [resolvable:$true] %s45
      %s47 = sshll.u32 [#allocation7], 4
      %s48 = int_to_ptr.vmem [resolvable:$true] %s47
      %50 = dma.hbm_to_vmem [thread:$0]  %s46, 32, %s48, [#allocation6]
    $region13: #{tpu_custom_call.1} parent=1 // pred_fallthru
      _
    // Predicated region
    $region14: #{tpu_custom_call.1} parent=1 // pred_check
      _
    $region15: #{tpu_custom_call.1} parent=1 // pred_check_branch
      %52 = sbr.rel (0) target = $region17
    $region16: #{tpu_custom_call.1} parent=1 // pred_region
      %54 = vsyncadd [#allocation9], 0
      %s55 = sshll.u32 %s3, 4
      %s56 = int_to_ptr.hbm [resolvable:$true] %s55
      %s57 = sshll.u32 [#allocation8], 4
      %s58 = int_to_ptr.vmem [resolvable:$true] %s57
      %63 = dma.hbm_to_vmem [thread:$0]  %s56, 2048, %s58, [#allocation9], 64, 64, 4
    $region17: #{tpu_custom_call.1} parent=1 // pred_fallthru
      _
    // Predicated region
    $region18: #{tpu_custom_call.1} parent=1 // pred_check
      _
    $region19: #{tpu_custom_call.1} parent=1 // pred_check_branch
      %65 = sbr.rel (0) target = $region21
    $region20: #{tpu_custom_call.1} parent=1 // pred_region
      _
    $region21: #{tpu_custom_call.1} parent=1 // pred_fallthru
      _
    // Predicated region
    $region22: #{tpu_custom_call.1} parent=1 // pred_check
      _
    $region23: #{tpu_custom_call.1} parent=1 // pred_check_branch
      %67 = sbr.rel (0) target = $region25
    $region24: #{tpu_custom_call.1} parent=1 // pred_region
      %69 = dma.done [#allocation3], 128
    $region25: #{tpu_custom_call.1} parent=1 // pred_fallthru
      _
    // Predicated region
    $region26: #{tpu_custom_call.1} parent=1 // pred_check
      _
    $region27: #{tpu_custom_call.1} parent=1 // pred_check_branch
      %71 = sbr.rel (0) target = $region29
    $region28: #{tpu_custom_call.1} parent=1 // pred_region
      %73 = dma.done [#allocation6], 2048
    $region29: #{tpu_custom_call.1} parent=1 // pred_fallthru
      _
    // Predicated region
    $region30: #{tpu_custom_call.1} parent=1 // pred_check
      _
    $region31: #{tpu_custom_call.1} parent=1 // pred_check_branch
      %75 = sbr.rel (0) target = $region33
    $region32: #{tpu_custom_call.1} parent=1 // pred_region
      %77 = dma.done [#allocation6], 32
    $region33: #{tpu_custom_call.1} parent=1 // pred_fallthru
      _
    // Predicated region
    $region34: #{tpu_custom_call.1} parent=1 // pred_check
      _
    $region35: #{tpu_custom_call.1} parent=1 // pred_check_branch
      %79 = sbr.rel (0) target = $region37
    $region36: #{tpu_custom_call.1} parent=1 // pred_region
      %81 = dma.done [#allocation9], 2048
    $region37: #{tpu_custom_call.1} parent=1 // pred_fallthru
      _
    %v82 = vld [vmem:[#allocation2] sm:$0xf]
    %v83 = vld [vmem:[#allocation2 + $0x4] sm:$0xf]
    %v84 = vld [vmem:[#allocation5] sm:$0xff]
    %v85 = vld [vmem:[#allocation5 + $0x8] sm:$0xff]
    %v86 = vld [vmem:[#allocation5 + $0x10] sm:$0xff]
    %v87 = vld [vmem:[#allocation5 + $0x18] sm:$0xff]
    %v88 = vld [vmem:[#allocation5 + $0x20] sm:$0xff]
    %v89 = vld [vmem:[#allocation5 + $0x28] sm:$0xff]
    %v90 = vld [vmem:[#allocation5 + $0x30] sm:$0xff]
    %v91 = vld [vmem:[#allocation5 + $0x38] sm:$0xff]
    %v92 = vld [vmem:[#allocation5 + $0x40] sm:$0xff]
    %v93 = vld [vmem:[#allocation5 + $0x48] sm:$0xff]
    %v94 = vld [vmem:[#allocation5 + $0x50] sm:$0xff]
    %v95 = vld [vmem:[#allocation5 + $0x58] sm:$0xff]
    %v96 = vld [vmem:[#allocation5 + $0x60] sm:$0xff]
    %v97 = vld [vmem:[#allocation5 + $0x68] sm:$0xff]
    %v98 = vld [vmem:[#allocation5 + $0x70] sm:$0xff]
    %v99 = vld [vmem:[#allocation5 + $0x78] sm:$0xff]
    %v100 = vld [vmem:[#allocation7] sm:$0x3]
    %v102 = vperm.slane %v100, 0
    %v103 = vperm.slane %v100, 1
    %v108 = vunpack.c.l.b16 %v82
    %v109 = vunpack.c.l.b16 %v83
    %v110 = vpack.c.b16 %v109, %v108
    %v128 = vunpack.c.l.b16 %v84
    %v129 = vunpack.c.h.b16 %v84
    %v130 = vunpack.c.l.b16 %v85
    %v131 = vunpack.c.h.b16 %v85
    %v132 = vunpack.c.l.b16 %v86
    %v133 = vunpack.c.h.b16 %v86
    %v134 = vunpack.c.l.b16 %v87
    %v135 = vunpack.c.h.b16 %v87
    %v136 = vunpack.c.l.b16 %v88
    %v137 = vunpack.c.h.b16 %v88
    %v138 = vunpack.c.l.b16 %v89
    %v139 = vunpack.c.h.b16 %v89
    %v140 = vunpack.c.l.b16 %v90
    %v141 = vunpack.c.h.b16 %v90
    %v142 = vunpack.c.l.b16 %v91
    %v143 = vunpack.c.h.b16 %v91
    %v144 = vunpack.c.l.b16 %v92
    %v145 = vunpack.c.h.b16 %v92
    %v146 = vunpack.c.l.b16 %v93
    %v147 = vunpack.c.h.b16 %v93
    %v148 = vunpack.c.l.b16 %v94
    %v149 = vunpack.c.h.b16 %v94
    %v150 = vunpack.c.l.b16 %v95
    %v151 = vunpack.c.h.b16 %v95
    %v152 = vunpack.c.l.b16 %v96
    %v153 = vunpack.c.h.b16 %v96
    %v154 = vunpack.c.l.b16 %v97
    %v155 = vunpack.c.h.b16 %v97
    %v156 = vunpack.c.l.b16 %v98
    %v157 = vunpack.c.h.b16 %v98
    %v158 = vunpack.c.l.b16 %v99
    %v159 = vunpack.c.h.b16 %v99
    %v160 = vpack.c.b16 %v130, %v128
    %v161 = vpack.c.b16 %v131, %v129
    %v162 = vpack.c.b16 %v134, %v132
    %v163 = vpack.c.b16 %v135, %v133
    %v164 = vpack.c.b16 %v138, %v136
    %v165 = vpack.c.b16 %v139, %v137
    %v166 = vpack.c.b16 %v142, %v140
    %v167 = vpack.c.b16 %v143, %v141
    %v168 = vpack.c.b16 %v146, %v144
    %v169 = vpack.c.b16 %v147, %v145
    %v170 = vpack.c.b16 %v150, %v148
    %v171 = vpack.c.b16 %v151, %v149
    %v172 = vpack.c.b16 %v154, %v152
    %v173 = vpack.c.b16 %v155, %v153
    %v174 = vpack.c.b16 %v158, %v156
    %v175 = vpack.c.b16 %v159, %v157
    %192 = vmatpush.bf16.msra.mxu0 %v174
    %193 = vmatpush.bf16.msra.mxu0 %v172
    %194 = vmatpush.bf16.msra.mxu0 %v170
    %195 = vmatpush.bf16.msra.mxu0 %v168
    %196 = vmatpush.bf16.msra.mxu0 %v166
    %197 = vmatpush.bf16.msra.mxu0 %v164
    %198 = vmatpush.bf16.msra.mxu0 %v162
    %199 = vmatpush.bf16.msra.mxu0 %v160
    %200 = vmatmul.bf16.gmra.mxu0 %v110
    %v201 = vpop.f32.mrf.mxu0
    %v202 = vadd.f32 %v102, %v201
    %v203 = vpop.f32.mrf.mxu0
    %v204 = vadd.f32 %v102, %v203
    %205 = vdwg.mxu0
    %206 = vmatpush.bf16.msra.mxu0 %v175
    %207 = vmatpush.bf16.msra.mxu0 %v173
    %208 = vmatpush.bf16.msra.mxu0 %v171
    %209 = vmatpush.bf16.msra.mxu0 %v169
    %210 = vmatpush.bf16.msra.mxu0 %v167
    %211 = vmatpush.bf16.msra.mxu0 %v165
    %212 = vmatpush.bf16.msra.mxu0 %v163
    %213 = vmatpush.bf16.msra.mxu0 %v161
    %214 = vmatmul.bf16.gmra.mxu0 %v110
    %v215 = vpop.f32.mrf.mxu0
    %v216 = vadd.f32 %v103, %v215
    %v217 = vpop.f32.mrf.mxu0
    %v218 = vadd.f32 %v103, %v217
    %219 = vdwg.mxu0
    %v220 = vmul.f32 %v202, 0.5
    %v221 = vmul.f32 %v216, 0.5
    %v222 = vmul.f32 %v204, 0.5
    %v223 = vmul.f32 %v218, 0.5
    %v224 = vmul.f32 %v202, 0.70710677
    %v225 = vmul.f32 %v216, 0.70710677
    %v226 = vmul.f32 %v204, 0.70710677
    %v227 = vmul.f32 %v218, 0.70710677
    %v228 = vmul.f32 %v224, %v224
    %v229 = vmin.f32 16.0, %v228
    %v230 = vmul.f32 %v229, 2.1237322e-06
    %v231 = vadd.f32 %v230, 0.00028619796
    %v232 = vmul.f32 %v229, %v231
    %v233 = vadd.f32 %v232, 0.0036580483
    %v234 = vmul.f32 %v229, %v233
    %v235 = vadd.f32 %v234, 0.05243302
    %v236 = vmul.f32 %v229, %v235
    %v237 = vadd.f32 %v236, 0.18741608
    %v238 = vmul.f32 %v229, %v237
    %v239 = vadd.f32 %v238, 1.1283791
    %v240 = vmul.f32 %v224, %v239
    %v241 = vmul.f32 %v229, 3.8918573e-05
    %v242 = vadd.f32 %v241, 0.001143296
    %v243 = vmul.f32 %v229, %v242
    %v244 = vadd.f32 %v243, 0.014752088
    %v245 = vmul.f32 %v229, %v244
    %v246 = vadd.f32 %v245, 0.112945676
    %v247 = vmul.f32 %v229, %v246
    %v248 = vadd.f32 %v247, 0.4994258
    %v249 = vmul.f32 %v229, %v248
    %v250 = vadd.f32 %v249, 1.0
    %v251 = vrcp.pop %v250
    %v252 = vmul.f32 %v250, %v251
    %v253 = vsub.f32 1.0, %v252
    %v254 = vmul.f32 %v251, %v253
    %v255 = vadd.f32 %v251, %v254
    %vm256 = vweird.f32 %v250
    %vm257 = vweird.f32 %v251
    %vm258 = vmor %vm256, %vm257
    %v259 = vsel %vm258, %v251, %v255
    %v260 = vand.u32 2147483647, %v250
    %vm261 = vcmp.eq.f32.partialorder %v260, 8.507059e+37
    %v262 = vand.u32 %v250, 2147483648
    %v263 = vor.u32 1.1754944e-38, %v262
    %v264 = vsel %vm261, %v263, %v259
    %v265 = vmul.f32 %v240, %v264
    %v266 = vmin.f32 %v265, 1.0
    %v267 = vmax.f32 %v266, -1.0
    %v268 = vmul.f32 %v225, %v225
    %v269 = vmin.f32 16.0, %v268
    %v270 = vmul.f32 %v269, 2.1237322e-06
    %v271 = vadd.f32 %v270, 0.00028619796
    %v272 = vmul.f32 %v269, %v271
    %v273 = vadd.f32 %v272, 0.0036580483
    %v274 = vmul.f32 %v269, %v273
    %v275 = vadd.f32 %v274, 0.05243302
    %v276 = vmul.f32 %v269, %v275
    %v277 = vadd.f32 %v276, 0.18741608
    %v278 = vmul.f32 %v269, %v277
    %v279 = vadd.f32 %v278, 1.1283791
    %v280 = vmul.f32 %v225, %v279
    %v281 = vmul.f32 %v269, 3.8918573e-05
    %v282 = vadd.f32 %v281, 0.001143296
    %v283 = vmul.f32 %v269, %v282
    %v284 = vadd.f32 %v283, 0.014752088
    %v285 = vmul.f32 %v269, %v284
    %v286 = vadd.f32 %v285, 0.112945676
    %v287 = vmul.f32 %v269, %v286
    %v288 = vadd.f32 %v287, 0.4994258
    %v289 = vmul.f32 %v269, %v288
    %v290 = vadd.f32 %v289, 1.0
    %v291 = vrcp.pop %v290
    %v292 = vmul.f32 %v290, %v291
    %v293 = vsub.f32 1.0, %v292
    %v294 = vmul.f32 %v291, %v293
    %v295 = vadd.f32 %v291, %v294
    %vm296 = vweird.f32 %v290
    %vm297 = vweird.f32 %v291
    %vm298 = vmor %vm296, %vm297
    %v299 = vsel %vm298, %v291, %v295
    %v300 = vand.u32 2147483647, %v290
    %vm301 = vcmp.eq.f32.partialorder %v300, 8.507059e+37
    %v302 = vand.u32 %v290, 2147483648
    %v303 = vor.u32 1.1754944e-38, %v302
    %v304 = vsel %vm301, %v303, %v299
    %v305 = vmul.f32 %v280, %v304
    %v306 = vmin.f32 %v305, 1.0
    %v307 = vmax.f32 %v306, -1.0
    %v308 = vmul.f32 %v226, %v226
    %v309 = vmin.f32 16.0, %v308
    %v310 = vmul.f32 %v309, 2.1237322e-06
    %v311 = vadd.f32 %v310, 0.00028619796
    %v312 = vmul.f32 %v309, %v311
    %v313 = vadd.f32 %v312, 0.0036580483
    %v314 = vmul.f32 %v309, %v313
    %v315 = vadd.f32 %v314, 0.05243302
    %v316 = vmul.f32 %v309, %v315
    %v317 = vadd.f32 %v316, 0.18741608
    %v318 = vmul.f32 %v309, %v317
    %v319 = vadd.f32 %v318, 1.1283791
    %v320 = vmul.f32 %v226, %v319
    %v321 = vmul.f32 %v309, 3.8918573e-05
    %v322 = vadd.f32 %v321, 0.001143296
    %v323 = vmul.f32 %v309, %v322
    %v324 = vadd.f32 %v323, 0.014752088
    %v325 = vmul.f32 %v309, %v324
    %v326 = vadd.f32 %v325, 0.112945676
    %v327 = vmul.f32 %v309, %v326
    %v328 = vadd.f32 %v327, 0.4994258
    %v329 = vmul.f32 %v309, %v328
    %v330 = vadd.f32 %v329, 1.0
    %v331 = vrcp.pop %v330
    %v332 = vmul.f32 %v330, %v331
    %v333 = vsub.f32 1.0, %v332
    %v334 = vmul.f32 %v331, %v333
    %v335 = vadd.f32 %v331, %v334
    %vm336 = vweird.f32 %v330
    %vm337 = vweird.f32 %v331
    %vm338 = vmor %vm336, %vm337
    %v339 = vsel %vm338, %v331, %v335
    %v340 = vand.u32 2147483647, %v330
    %vm341 = vcmp.eq.f32.partialorder %v340, 8.507059e+37
    %v342 = vand.u32 %v330, 2147483648
    %v343 = vor.u32 1.1754944e-38, %v342
    %v344 = vsel %vm341, %v343, %v339
    %v345 = vmul.f32 %v320, %v344
    %v346 = vmin.f32 %v345, 1.0
    %v347 = vmax.f32 %v346, -1.0
    %v348 = vmul.f32 %v227, %v227
    %v349 = vmin.f32 16.0, %v348
    %v350 = vmul.f32 %v349, 2.1237322e-06
    %v351 = vadd.f32 %v350, 0.00028619796
    %v352 = vmul.f32 %v349, %v351
    %v353 = vadd.f32 %v352, 0.0036580483
    %v354 = vmul.f32 %v349, %v353
    %v355 = vadd.f32 %v354, 0.05243302
    %v356 = vmul.f32 %v349, %v355
    %v357 = vadd.f32 %v356, 0.18741608
    %v358 = vmul.f32 %v349, %v357
    %v359 = vadd.f32 %v358, 1.1283791
    %v360 = vmul.f32 %v227, %v359
    %v361 = vmul.f32 %v349, 3.8918573e-05
    %v362 = vadd.f32 %v361, 0.001143296
    %v363 = vmul.f32 %v349, %v362
    %v364 = vadd.f32 %v363, 0.014752088
    %v365 = vmul.f32 %v349, %v364
    %v366 = vadd.f32 %v365, 0.112945676
    %v367 = vmul.f32 %v349, %v366
    %v368 = vadd.f32 %v367, 0.4994258
    %v369 = vmul.f32 %v349, %v368
    %v370 = vadd.f32 %v369, 1.0
    %v371 = vrcp.pop %v370
    %v372 = vmul.f32 %v370, %v371
    %v373 = vsub.f32 1.0, %v372
    %v374 = vmul.f32 %v371, %v373
    %v375 = vadd.f32 %v371, %v374
    %vm376 = vweird.f32 %v370
    %vm377 = vweird.f32 %v371
    %vm378 = vmor %vm376, %vm377
    %v379 = vsel %vm378, %v371, %v375
    %v380 = vand.u32 2147483647, %v370
    %vm381 = vcmp.eq.f32.partialorder %v380, 8.507059e+37
    %v382 = vand.u32 %v370, 2147483648
    %v383 = vor.u32 1.1754944e-38, %v382
    %v384 = vsel %vm381, %v383, %v379
    %v385 = vmul.f32 %v360, %v384
    %v386 = vmin.f32 %v385, 1.0
    %v387 = vmax.f32 %v386, -1.0
    %v388 = vadd.f32 %v267, 1.0
    %v389 = vadd.f32 %v307, 1.0
    %v390 = vadd.f32 %v347, 1.0
    %v391 = vadd.f32 %v387, 1.0
    %v392 = vmul.f32 %v220, %v388
    %v393 = vmul.f32 %v221, %v389
    %v394 = vmul.f32 %v222, %v390
    %v395 = vmul.f32 %v223, %v391
    %v396 = vpack.c.bf16 %v394, %v392
    %v397 = vpack.c.bf16 %v395, %v393
    %v398 = vld [vmem:[#allocation8] sm:$0xf]
    %v399 = vld [vmem:[#allocation8 + $0x4] sm:$0xf]
    %v400 = vld [vmem:[#allocation8 + $0x8] sm:$0xf]
    %v401 = vld [vmem:[#allocation8 + $0xc] sm:$0xf]
    %v402 = vld [vmem:[#allocation8 + $0x10] sm:$0xf]
    %v403 = vld [vmem:[#allocation8 + $0x14] sm:$0xf]
    %v404 = vld [vmem:[#allocation8 + $0x18] sm:$0xf]
    %v405 = vld [vmem:[#allocation8 + $0x1c] sm:$0xf]
    %v406 = vld [vmem:[#allocation8 + $0x20] sm:$0xf]
    %v407 = vld [vmem:[#allocation8 + $0x24] sm:$0xf]
    %v408 = vld [vmem:[#allocation8 + $0x28] sm:$0xf]
    %v409 = vld [vmem:[#allocation8 + $0x2c] sm:$0xf]
    %v410 = vld [vmem:[#allocation8 + $0x30] sm:$0xf]
    %v411 = vld [vmem:[#allocation8 + $0x34] sm:$0xf]
    %v412 = vld [vmem:[#allocation8 + $0x38] sm:$0xf]
    %v413 = vld [vmem:[#allocation8 + $0x3c] sm:$0xf]
    %v414 = vld [vmem:[#allocation8 + $0x40] sm:$0xf]
    %v415 = vld [vmem:[#allocation8 + $0x44] sm:$0xf]
    %v416 = vld [vmem:[#allocation8 + $0x48] sm:$0xf]
    %v417 = vld [vmem:[#allocation8 + $0x4c] sm:$0xf]
    %v418 = vld [vmem:[#allocation8 + $0x50] sm:$0xf]
    %v419 = vld [vmem:[#allocation8 + $0x54] sm:$0xf]
    %v420 = vld [vmem:[#allocation8 + $0x58] sm:$0xf]
    %v421 = vld [vmem:[#allocation8 + $0x5c] sm:$0xf]
    %v422 = vld [vmem:[#allocation8 + $0x60] sm:$0xf]
    %v423 = vld [vmem:[#allocation8 + $0x64] sm:$0xf]
    %v424 = vld [vmem:[#allocation8 + $0x68] sm:$0xf]
    %v425 = vld [vmem:[#allocation8 + $0x6c] sm:$0xf]
    %v426 = vld [vmem:[#allocation8 + $0x70] sm:$0xf]
    %v427 = vld [vmem:[#allocation8 + $0x74] sm:$0xf]
    %v428 = vld [vmem:[#allocation8 + $0x78] sm:$0xf]
    %v429 = vld [vmem:[#allocation8 + $0x7c] sm:$0xf]
    %v430 = vld [vmem:[%s4] sm:$0x1]
    %v432 = vperm.slane %v430, 0
    %v466 = vunpack.c.l.b16 %v398
    %v467 = vunpack.c.l.b16 %v399
    %v468 = vunpack.c.l.b16 %v400
    %v469 = vunpack.c.l.b16 %v401
    %v470 = vunpack.c.l.b16 %v402
    %v471 = vunpack.c.l.b16 %v403
    %v472 = vunpack.c.l.b16 %v404
    %v473 = vunpack.c.l.b16 %v405
    %v474 = vunpack.c.l.b16 %v406
    %v475 = vunpack.c.l.b16 %v407
    %v476 = vunpack.c.l.b16 %v408
    %v477 = vunpack.c.l.b16 %v409
    %v478 = vunpack.c.l.b16 %v410
    %v479 = vunpack.c.l.b16 %v411
    %v480 = vunpack.c.l.b16 %v412
    %v481 = vunpack.c.l.b16 %v413
    %v482 = vunpack.c.l.b16 %v414
    %v483 = vunpack.c.l.b16 %v415
    %v484 = vunpack.c.l.b16 %v416
    %v485 = vunpack.c.l.b16 %v417
    %v486 = vunpack.c.l.b16 %v418
    %v487 = vunpack.c.l.b16 %v419
    %v488 = vunpack.c.l.b16 %v420
    %v489 = vunpack.c.l.b16 %v421
    %v490 = vunpack.c.l.b16 %v422
    %v491 = vunpack.c.l.b16 %v423
    %v492 = vunpack.c.l.b16 %v424
    %v493 = vunpack.c.l.b16 %v425
    %v494 = vunpack.c.l.b16 %v426
    %v495 = vunpack.c.l.b16 %v427
    %v496 = vunpack.c.l.b16 %v428
    %v497 = vunpack.c.l.b16 %v429
    %v498 = vpack.c.b16 %v467, %v466
    %v499 = vpack.c.b16 %v469, %v468
    %v500 = vpack.c.b16 %v471, %v470
    %v501 = vpack.c.b16 %v473, %v472
    %v502 = vpack.c.b16 %v475, %v474
    %v503 = vpack.c.b16 %v477, %v476
    %v504 = vpack.c.b16 %v479, %v478
    %v505 = vpack.c.b16 %v481, %v480
    %v506 = vpack.c.b16 %v483, %v482
    %v507 = vpack.c.b16 %v485, %v484
    %v508 = vpack.c.b16 %v487, %v486
    %v509 = vpack.c.b16 %v489, %v488
    %v510 = vpack.c.b16 %v491, %v490
    %v511 = vpack.c.b16 %v493, %v492
    %v512 = vpack.c.b16 %v495, %v494
    %v513 = vpack.c.b16 %v497, %v496
    %530 = vmatpush.bf16.msra.mxu0 %v505
    %531 = vmatpush.bf16.msra.mxu0 %v504
    %532 = vmatpush.bf16.msra.mxu0 %v503
    %533 = vmatpush.bf16.msra.mxu0 %v502
    %534 = vmatpush.bf16.msra.mxu0 %v501
    %535 = vmatpush.bf16.msra.mxu0 %v500
    %536 = vmatpush.bf16.msra.mxu0 %v499
    %537 = vmatpush.bf16.msra.mxu0 %v498
    %538 = vmatmul.bf16.gmra.mxu0 %v396
    %v539 = vpop.f32.mrf.mxu0
    %v540 = vadd.f32 %v432, %v539
    %v541 = vpop.f32.mrf.mxu0
    %v542 = vadd.f32 %v432, %v541
    %543 = vdwg.mxu0
    %544 = vmatpush.bf16.msra.mxu0 %v513
    %545 = vmatpush.bf16.msra.mxu0 %v512
    %546 = vmatpush.bf16.msra.mxu0 %v511
    %547 = vmatpush.bf16.msra.mxu0 %v510
    %548 = vmatpush.bf16.msra.mxu0 %v509
    %549 = vmatpush.bf16.msra.mxu0 %v508
    %550 = vmatpush.bf16.msra.mxu0 %v507
    %551 = vmatpush.bf16.msra.mxu0 %v506
    %552 = vmatmul.bf16.gmra.mxu0 %v397
    %v553 = vpop.f32.mrf.mxu0
    %v554 = vadd.f32 %v540, %v553
    %v555 = vpop.f32.mrf.mxu0
    %v556 = vadd.f32 %v542, %v555
    %557 = vdwg.mxu0
    %558 = vst [vmem:[#allocation10] sm:$0xff] %v554
    %559 = vst [vmem:[#allocation10 + $0x8] sm:$0xff] %v556
    // Predicated region
    $region38: #{tpu_custom_call.1} parent=1 // pred_check
      _
    $region39: #{tpu_custom_call.1} parent=1 // pred_check_branch
      %561 = sbr.rel (0) target = $region41
    $region40: #{tpu_custom_call.1} parent=1 // pred_region
      %563 = vsyncadd [#allocation4], 0
      %s564 = sshll.u32 [#allocation10], 4
      %s565 = int_to_ptr.vmem [resolvable:$true] %s564
      %s566 = sshll.u32 %s5, 4
      %s567 = int_to_ptr.hbm [resolvable:$true] %s566
      %572 = dma.vmem_to_hbm [thread:$0]  %s565, 256, %s567, [#allocation4], 128, 128, 8
    $region41: #{tpu_custom_call.1} parent=1 // pred_fallthru
      _
    // Predicated region
    $region42: #{tpu_custom_call.1} parent=1 // pred_check
      _
    $region43: #{tpu_custom_call.1} parent=1 // pred_check_branch
      %574 = sbr.rel (0) target = $region45
    $region44: #{tpu_custom_call.1} parent=1 // pred_region
      %576 = dma.done [#allocation4], 256
    $region45: #{tpu_custom_call.1} parent=1 // pred_fallthru
      _
    %577 = vsyncpa [#allocation3], 1
    %578 = vsyncpa [#allocation6], 1
    %579 = vsyncpa [#allocation9], 1
    %580 = vsyncpa [#allocation4], 1

// kernel: tpu_custom_call.1
$region0: #{tpu_custom_call.1}
  #allocation0 [shape = 'u32[]', space=smem, size = 0x4, offset = 0x4, fixed_abs, tag = 'smem constant byte address 0x4 - core index']
  #allocation1 [shape = 'u32[72,128]{1,0:T(1,128)}', space=vmem, size = 0x9000, scoped, tag = 'internal scratch']
  %s0 = inlined_call_operand.hbm [shape: bf16[16,128], index: 0, kind: input, shape index: {}]
  %s1 = inlined_call_operand.hbm [shape: bf16[128,256], index: 1, kind: input, shape index: {}]
  %s2 = inlined_call_operand.hbm [shape: f32[1,256], index: 2, kind: input, shape index: {}]
  %s3 = inlined_call_operand.hbm [shape: bf16[256,128], index: 3, kind: input, shape index: {}]
  %s4 = inlined_call_operand.vmem [shape: f32[1,128], index: 4, kind: input, shape index: {}]
  %s5 = inlined_call_operand.hbm [shape: f32[16,128], index: 5, kind: output, shape index: {}]
  %s6 = sld [smem:[#allocation0]]
  $region46: #{tpu_custom_call.1} parent=0
    _
  %s8 = ssub.s32 1, %s6
  %s9 = scalar_select 0, %s8, %s6
  $region1: #{tpu_custom_call.1} parent=0
    #allocation2 [shape = 'u8[4096]{0}', space=vmem, size = 0x1000, scoped, tag = 'input window, operand 0, single buffered']
    #allocation3 [shape = 's32[1]{0}', space=sflag, size = 0x4, scoped, tag = 'scoped memory for tpu_custom_call.1']
    #allocation4 [shape = 's32[1]{0}', space=sflag, size = 0x4, scoped, tag = 'scoped memory for tpu_custom_call.1']
    #allocation5 [shape = 'u8[65536]{0}', space=vmem, size = 0x10000, scoped, tag = 'input window, operand 1, single buffered']
    #allocation6 [shape = 's32[1]{0}', space=sflag, size = 0x4, scoped, tag = 'scoped memory for tpu_custom_call.1']
    #allocation7 [shape = 'u8[1024]{0}', space=vmem, size = 0x400, scoped, tag = 'input window, operand 2, single buffered']
    #allocation8 [shape = 'u8[65536]{0}', space=vmem, size = 0x10000, scoped, tag = 'input window, operand 3, single buffered']
    #allocation9 [shape = 's32[1]{0}', space=sflag, size = 0x4, scoped, tag = 'scoped memory for tpu_custom_call.1']
    #allocation10 [shape = 'u8[8192]{0}', space=vmem, size = 0x2000, scoped, tag = 'output window, operand 0, single buffered']
    %10 = vsyncpa [#allocation3], 0
    %11 = vsyncpa [#allocation6], 0
    %12 = vsyncpa [#allocation9], 0
    %13 = vsyncpa [#allocation4], 0
    // Predicated region
    $region2: #{tpu_custom_call.1} parent=1 // pred_check
      _
    $region3: #{tpu_custom_call.1} parent=1 // pred_check_branch
      %15 = sbr.rel (0) target = $region5
    $region4: #{tpu_custom_call.1} parent=1 // pred_region
      %17 = vsyncadd [#allocation3], 0
      %s18 = sshll.u32 %s0, 4
      %s19 = int_to_ptr.hbm [resolvable:$true] %s18
      %s20 = sshll.u32 [#allocation2], 4
      %s21 = int_to_ptr.vmem [resolvable:$true] %s20
      %26 = dma.hbm_to_vmem [thread:$0]  %s19, 128, %s21, [#allocation3], 64, 64, 4
    $region5: #{tpu_custom_call.1} parent=1 // pred_fallthru
      _
    // Predicated region
    $region6: #{tpu_custom_call.1} parent=1 // pred_check
      _
    $region7: #{tpu_custom_call.1} parent=1 // pred_check_branch
      %28 = sbr.rel (0) target = $region9
    $region8: #{tpu_custom_call.1} parent=1 // pred_region
      %30 = vsyncadd [#allocation6], 0
      %s31 = sshll.u32 %s1, 4
      %s32 = int_to_ptr.hbm [resolvable:$true] %s31
      %s33 = sshll.u32 [#allocation5], 4
      %s34 = int_to_ptr.vmem [resolvable:$true] %s33
      %39 = dma.hbm_to_vmem [thread:$0]  %s32, 2048, %s34, [#allocation6], 128, 128, 8
    $region9: #{tpu_custom_call.1} parent=1 // pred_fallthru
      _
    // Predicated region
    $region10: #{tpu_custom_call.1} parent=1 // pred_check
      _
    $region11: #{tpu_custom_call.1} parent=1 // pred_check_branch
      %41 = sbr.rel (0) target = $region13
    $region12: #{tpu_custom_call.1} parent=1 // pred_region
      %43 = vsyncadd [#allocation6], 0
      %s45 = sshll.u32 %s2, 4
      %s46 = int_to_ptr.hbm [resolvable:$true] %s45
      %s47 = sshll.u32 [#allocation7], 4
      %s48 = int_to_ptr.vmem [resolvable:$true] %s47
      %50 = dma.hbm_to_vmem [thread:$0]  %s46, 32, %s48, [#allocation6]
    $region13: #{tpu_custom_call.1} parent=1 // pred_fallthru
      _
    // Predicated region
    $region14: #{tpu_custom_call.1} parent=1 // pred_check
      _
    $region15: #{tpu_custom_call.1} parent=1 // pred_check_branch
      %52 = sbr.rel (0) target = $region17
    $region16: #{tpu_custom_call.1} parent=1 // pred_region
      %54 = vsyncadd [#allocation9], 0
      %s55 = sshll.u32 %s3, 4
      %s56 = int_to_ptr.hbm [resolvable:$true] %s55
      %s57 = sshll.u32 [#allocation8], 4
      %s58 = int_to_ptr.vmem [resolvable:$true] %s57
      %63 = dma.hbm_to_vmem [thread:$0]  %s56, 2048, %s58, [#allocation9], 64, 64, 4
    $region17: #{tpu_custom_call.1} parent=1 // pred_fallthru
      _
    // Predicated region
    $region18: #{tpu_custom_call.1} parent=1 // pred_check
      _
    $region19: #{tpu_custom_call.1} parent=1 // pred_check_branch
      %65 = sbr.rel (0) target = $region21
    $region20: #{tpu_custom_call.1} parent=1 // pred_region
      _
    $region21: #{tpu_custom_call.1} parent=1 // pred_fallthru
      _
    // Predicated region
    $region22: #{tpu_custom_call.1} parent=1 // pred_check
      _
    $region23: #{tpu_custom_call.1} parent=1 // pred_check_branch
      %67 = sbr.rel (0) target = $region25
    $region24: #{tpu_custom_call.1} parent=1 // pred_region
      %69 = dma.done [#allocation3], 128
    $region25: #{tpu_custom_call.1} parent=1 // pred_fallthru
      _
    // Predicated region
    $region26: #{tpu_custom_call.1} parent=1 // pred_check
      _
    $region27: #{tpu_custom_call.1} parent=1 // pred_check_branch
      %71 = sbr.rel (0) target = $region29
    $region28: #{tpu_custom_call.1} parent=1 // pred_region
      %73 = dma.done [#allocation6], 2048
    $region29: #{tpu_custom_call.1} parent=1 // pred_fallthru
      _
    // Predicated region
    $region30: #{tpu_custom_call.1} parent=1 // pred_check
      _
    $region31: #{tpu_custom_call.1} parent=1 // pred_check_branch
      %75 = sbr.rel (0) target = $region33
    $region32: #{tpu_custom_call.1} parent=1 // pred_region
      %77 = dma.done [#allocation6], 32
    $region33: #{tpu_custom_call.1} parent=1 // pred_fallthru
      _
    // Predicated region
    $region34: #{tpu_custom_call.1} parent=1 // pred_check
      _
    $region35: #{tpu_custom_call.1} parent=1 // pred_check_branch
      %79 = sbr.rel (0) target = $region37
    $region36: #{tpu_custom_call.1} parent=1 // pred_region
      %81 = dma.done [#allocation9], 2048
    $region37: #{tpu_custom_call.1} parent=1 // pred_fallthru
      _
    %v82 = vld [vmem:[#allocation2] sm:$0xf]
    %v83 = vld [vmem:[#allocation2 + $0x4] sm:$0xf]
    %v84 = vld [vmem:[#allocation5] sm:$0xff]
    %v85 = vld [vmem:[#allocation5 + $0x8] sm:$0xff]
    %v86 = vld [vmem:[#allocation5 + $0x10] sm:$0xff]
    %v87 = vld [vmem:[#allocation5 + $0x18] sm:$0xff]
    %v88 = vld [vmem:[#allocation5 + $0x20] sm:$0xff]
    %v89 = vld [vmem:[#allocation5 + $0x28] sm:$0xff]
    %v90 = vld [vmem:[#allocation5 + $0x30] sm:$0xff]
    %v91 = vld [vmem:[#allocation5 + $0x38] sm:$0xff]
    %v92 = vld [vmem:[#allocation5 + $0x40] sm:$0xff]
    %v93 = vld [vmem:[#allocation5 + $0x48] sm:$0xff]
    %v94 = vld [vmem:[#allocation5 + $0x50] sm:$0xff]
    %v95 = vld [vmem:[#allocation5 + $0x58] sm:$0xff]
    %v96 = vld [vmem:[#allocation5 + $0x60] sm:$0xff]
    %v97 = vld [vmem:[#allocation5 + $0x68] sm:$0xff]
    %v98 = vld [vmem:[#allocation5 + $0x70] sm:$0xff]
    %v99 = vld [vmem:[#allocation5 + $0x78] sm:$0xff]
    %v100 = vld [vmem:[#allocation7] sm:$0x3]
    %v102 = vperm.slane %v100, 0
    %v103 = vperm.slane %v100, 1
    %v108 = vunpack.c.l.b16 %v82
    %v109 = vunpack.c.l.b16 %v83
    %v110 = vpack.c.b16 %v109, %v108
    %v128 = vunpack.c.l.b16 %v84
    %v129 = vunpack.c.h.b16 %v84
    %v130 = vunpack.c.l.b16 %v85
    %v131 = vunpack.c.h.b16 %v85
    %v132 = vunpack.c.l.b16 %v86
    %v133 = vunpack.c.h.b16 %v86
    %v134 = vunpack.c.l.b16 %v87
    %v135 = vunpack.c.h.b16 %v87
    %v136 = vunpack.c.l.b16 %v88
    %v137 = vunpack.c.h.b16 %v88
    %v138 = vunpack.c.l.b16 %v89
    %v139 = vunpack.c.h.b16 %v89
    %v140 = vunpack.c.l.b16 %v90
    %v141 = vunpack.c.h.b16 %v90
    %v142 = vunpack.c.l.b16 %v91
    %v143 = vunpack.c.h.b16 %v91
    %v144 = vunpack.c.l.b16 %v92
    %v145 = vunpack.c.h.b16 %v92
    %v146 = vunpack.c.l.b16 %v93
    %v147 = vunpack.c.h.b16 %v93
    %v148 = vunpack.c.l.b16 %v94
    %v149 = vunpack.c.h.b16 %v94
    %v150 = vunpack.c.l.b16 %v95
    %v151 = vunpack.c.h.b16 %v95
    %v152 = vunpack.c.l.b16 %v96
    %v153 = vunpack.c.h.b16 %v96
    %v154 = vunpack.c.l.b16 %v97
    %v155 = vunpack.c.h.b16 %v97
    %v156 = vunpack.c.l.b16 %v98
    %v157 = vunpack.c.h.b16 %v98
    %v158 = vunpack.c.l.b16 %v99
    %v159 = vunpack.c.h.b16 %v99
    %v160 = vpack.c.b16 %v130, %v128
    %v161 = vpack.c.b16 %v131, %v129
    %v162 = vpack.c.b16 %v134, %v132
    %v163 = vpack.c.b16 %v135, %v133
    %v164 = vpack.c.b16 %v138, %v136
    %v165 = vpack.c.b16 %v139, %v137
    %v166 = vpack.c.b16 %v142, %v140
    %v167 = vpack.c.b16 %v143, %v141
    %v168 = vpack.c.b16 %v146, %v144
    %v169 = vpack.c.b16 %v147, %v145
    %v170 = vpack.c.b16 %v150, %v148
    %v171 = vpack.c.b16 %v151, %v149
    %v172 = vpack.c.b16 %v154, %v152
    %v173 = vpack.c.b16 %v155, %v153
    %v174 = vpack.c.b16 %v158, %v156
    %v175 = vpack.c.b16 %v159, %v157
    %192 = vmatpush.bf16.msra.mxu0 %v174
    %193 = vmatpush.bf16.msra.mxu0 %v172
    %194 = vmatpush.bf16.msra.mxu0 %v170
    %195 = vmatpush.bf16.msra.mxu0 %v168
    %196 = vmatpush.bf16.msra.mxu0 %v166
    %197 = vmatpush.bf16.msra.mxu0 %v164
    %198 = vmatpush.bf16.msra.mxu0 %v162
    %199 = vmatpush.bf16.msra.mxu0 %v160
    %200 = vmatmul.bf16.gmra.mxu0 %v110
    %v201 = vpop.f32.mrf.mxu0
    %v202 = vadd.f32 %v102, %v201
    %v203 = vpop.f32.mrf.mxu0
    %v204 = vadd.f32 %v102, %v203
    %205 = vdwg.mxu0
    %206 = vmatpush.bf16.msra.mxu0 %v175
    %207 = vmatpush.bf16.msra.mxu0 %v173
    %208 = vmatpush.bf16.msra.mxu0 %v171
    %209 = vmatpush.bf16.msra.mxu0 %v169
    %210 = vmatpush.bf16.msra.mxu0 %v167
    %211 = vmatpush.bf16.msra.mxu0 %v165
    %212 = vmatpush.bf16.msra.mxu0 %v163
    %213 = vmatpush.bf16.msra.mxu0 %v161
    %214 = vmatmul.bf16.gmra.mxu0 %v110
    %v215 = vpop.f32.mrf.mxu0
    %v216 = vadd.f32 %v103, %v215
    %v217 = vpop.f32.mrf.mxu0
    %v218 = vadd.f32 %v103, %v217
    %219 = vdwg.mxu0
    %v220 = vmul.f32 %v202, 0.5
    %v221 = vmul.f32 %v216, 0.5
    %v222 = vmul.f32 %v204, 0.5
    %v223 = vmul.f32 %v218, 0.5
    %v224 = vmul.f32 %v202, 0.70710677
    %v225 = vmul.f32 %v216, 0.70710677
    %v226 = vmul.f32 %v204, 0.70710677
    %v227 = vmul.f32 %v218, 0.70710677
    %v228 = vmul.f32 %v224, %v224
    %v229 = vmin.f32 16.0, %v228
    %v230 = vmul.f32 %v229, 2.1237322e-06
    %v231 = vadd.f32 %v230, 0.00028619796
    %v232 = vmul.f32 %v229, %v231
    %v233 = vadd.f32 %v232, 0.0036580483
    %v234 = vmul.f32 %v229, %v233
    %v235 = vadd.f32 %v234, 0.05243302
    %v236 = vmul.f32 %v229, %v235
    %v237 = vadd.f32 %v236, 0.18741608
    %v238 = vmul.f32 %v229, %v237
    %v239 = vadd.f32 %v238, 1.1283791
    %v240 = vmul.f32 %v224, %v239
    %v241 = vmul.f32 %v229, 3.8918573e-05
    %v242 = vadd.f32 %v241, 0.001143296
    %v243 = vmul.f32 %v229, %v242
    %v244 = vadd.f32 %v243, 0.014752088
    %v245 = vmul.f32 %v229, %v244
    %v246 = vadd.f32 %v245, 0.112945676
    %v247 = vmul.f32 %v229, %v246
    %v248 = vadd.f32 %v247, 0.4994258
    %v249 = vmul.f32 %v229, %v248
    %v250 = vadd.f32 %v249, 1.0
    %v251 = vrcp.pop %v250
    %v252 = vmul.f32 %v250, %v251
    %v253 = vsub.f32 1.0, %v252
    %v254 = vmul.f32 %v251, %v253
    %v255 = vadd.f32 %v251, %v254
    %vm256 = vweird.f32 %v250
    %vm257 = vweird.f32 %v251
    %vm258 = vmor %vm256, %vm257
    %v259 = vsel %vm258, %v251, %v255
    %v260 = vand.u32 2147483647, %v250
    %vm261 = vcmp.eq.f32.partialorder %v260, 8.507059e+37
    %v262 = vand.u32 %v250, 2147483648
    %v263 = vor.u32 1.1754944e-38, %v262
    %v264 = vsel %vm261, %v263, %v259
    %v265 = vmul.f32 %v240, %v264
    %v266 = vmin.f32 %v265, 1.0
    %v267 = vmax.f32 %v266, -1.0
    %v268 = vmul.f32 %v225, %v225
    %v269 = vmin.f32 16.0, %v268
    %v270 = vmul.f32 %v269, 2.1237322e-06
    %v271 = vadd.f32 %v270, 0.00028619796
    %v272 = vmul.f32 %v269, %v271
    %v273 = vadd.f32 %v272, 0.0036580483
    %v274 = vmul.f32 %v269, %v273
    %v275 = vadd.f32 %v274, 0.05243302
    %v276 = vmul.f32 %v269, %v275
    %v277 = vadd.f32 %v276, 0.18741608
    %v278 = vmul.f32 %v269, %v277
    %v279 = vadd.f32 %v278, 1.1283791
    %v280 = vmul.f32 %v225, %v279
    %v281 = vmul.f32 %v269, 3.8918573e-05
    %v282 = vadd.f32 %v281, 0.001143296
    %v283 = vmul.f32 %v269, %v282
    %v284 = vadd.f32 %v283, 0.014752088
    %v285 = vmul.f32 %v269, %v284
    %v286 = vadd.f32 %v285, 0.112945676
    %v287 = vmul.f32 %v269, %v286
    %v288 = vadd.f32 %v287, 0.4994258
    %v289 = vmul.f32 %v269, %v288
    %v290 = vadd.f32 %v289, 1.0
    %v291 = vrcp.pop %v290
    %v292 = vmul.f32 %v290, %v291
    %v293 = vsub.f32 1.0, %v292
    %v294 = vmul.f32 %v291, %v293
    %v295 = vadd.f32 %v291, %v294
    %vm296 = vweird.f32 %v290
    %vm297 = vweird.f32 %v291
    %vm298 = vmor %vm296, %vm297
    %v299 = vsel %vm298, %v291, %v295
    %v300 = vand.u32 2147483647, %v290
    %vm301 = vcmp.eq.f32.partialorder %v300, 8.507059e+37
    %v302 = vand.u32 %v290, 2147483648
    %v303 = vor.u32 1.1754944e-38, %v302
    %v304 = vsel %vm301, %v303, %v299
    %v305 = vmul.f32 %v280, %v304
    %v306 = vmin.f32 %v305, 1.0
    %v307 = vmax.f32 %v306, -1.0
    %v308 = vmul.f32 %v226, %v226
    %v309 = vmin.f32 16.0, %v308
    %v310 = vmul.f32 %v309, 2.1237322e-06
    %v311 = vadd.f32 %v310, 0.00028619796
    %v312 = vmul.f32 %v309, %v311
    %v313 = vadd.f32 %v312, 0.0036580483
    %v314 = vmul.f32 %v309, %v313
    %v315 = vadd.f32 %v314, 0.05243302
    %v316 = vmul.f32 %v309, %v315
    %v317 = vadd.f32 %v316, 0.18741608
    %v318 = vmul.f32 %v309, %v317
    %v319 = vadd.f32 %v318, 1.1283791
    %v320 = vmul.f32 %v226, %v319
    %v321 = vmul.f32 %v309, 3.8918573e-05
    %v322 = vadd.f32 %v321, 0.001143296
    %v323 = vmul.f32 %v309, %v322
    %v324 = vadd.f32 %v323, 0.014752088
    %v325 = vmul.f32 %v309, %v324
    %v326 = vadd.f32 %v325, 0.112945676
    %v327 = vmul.f32 %v309, %v326
    %v328 = vadd.f32 %v327, 0.4994258
    %v329 = vmul.f32 %v309, %v328
    %v330 = vadd.f32 %v329, 1.0
    %v331 = vrcp.pop %v330
    %v332 = vmul.f32 %v330, %v331
    %v333 = vsub.f32 1.0, %v332
    %v334 = vmul.f32 %v331, %v333
    %v335 = vadd.f32 %v331, %v334
    %vm336 = vweird.f32 %v330
    %vm337 = vweird.f32 %v331
    %vm338 = vmor %vm336, %vm337
    %v339 = vsel %vm338, %v331, %v335
    %v340 = vand.u32 2147483647, %v330
    %vm341 = vcmp.eq.f32.partialorder %v340, 8.507059e+37
    %v342 = vand.u32 %v330, 2147483648
    %v343 = vor.u32 1.1754944e-38, %v342
    %v344 = vsel %vm341, %v343, %v339
    %v345 = vmul.f32 %v320, %v344
    %v346 = vmin.f32 %v345, 1.0
    %v347 = vmax.f32 %v346, -1.0
    %v348 = vmul.f32 %v227, %v227
    %v349 = vmin.f32 16.0, %v348
    %v350 = vmul.f32 %v349, 2.1237322e-06
    %v351 = vadd.f32 %v350, 0.00028619796
    %v352 = vmul.f32 %v349, %v351
    %v353 = vadd.f32 %v352, 0.0036580483
    %v354 = vmul.f32 %v349, %v353
    %v355 = vadd.f32 %v354, 0.05243302
    %v356 = vmul.f32 %v349, %v355
    %v357 = vadd.f32 %v356, 0.18741608
    %v358 = vmul.f32 %v349, %v357
    %v359 = vadd.f32 %v358, 1.1283791
    %v360 = vmul.f32 %v227, %v359
    %v361 = vmul.f32 %v349, 3.8918573e-05
    %v362 = vadd.f32 %v361, 0.001143296
    %v363 = vmul.f32 %v349, %v362
    %v364 = vadd.f32 %v363, 0.014752088
    %v365 = vmul.f32 %v349, %v364
    %v366 = vadd.f32 %v365, 0.112945676
    %v367 = vmul.f32 %v349, %v366
    %v368 = vadd.f32 %v367, 0.4994258
    %v369 = vmul.f32 %v349, %v368
    %v370 = vadd.f32 %v369, 1.0
    %v371 = vrcp.pop %v370
    %v372 = vmul.f32 %v370, %v371
    %v373 = vsub.f32 1.0, %v372
    %v374 = vmul.f32 %v371, %v373
    %v375 = vadd.f32 %v371, %v374
    %vm376 = vweird.f32 %v370
    %vm377 = vweird.f32 %v371
    %vm378 = vmor %vm376, %vm377
    %v379 = vsel %vm378, %v371, %v375
    %v380 = vand.u32 2147483647, %v370
    %vm381 = vcmp.eq.f32.partialorder %v380, 8.507059e+37
    %v382 = vand.u32 %v370, 2147483648
    %v383 = vor.u32 1.1754944e-38, %v382
    %v384 = vsel %vm381, %v383, %v379
    %v385 = vmul.f32 %v360, %v384
    %v386 = vmin.f32 %v385, 1.0
    %v387 = vmax.f32 %v386, -1.0
    %v388 = vadd.f32 %v267, 1.0
    %v389 = vadd.f32 %v307, 1.0
    %v390 = vadd.f32 %v347, 1.0
    %v391 = vadd.f32 %v387, 1.0
    %v392 = vmul.f32 %v220, %v388
    %v393 = vmul.f32 %v221, %v389
    %v394 = vmul.f32 %v222, %v390
    %v395 = vmul.f32 %v223, %v391
    %v396 = vpack.c.bf16 %v394, %v392
    %v397 = vpack.c.bf16 %v395, %v393
    %v398 = vld [vmem:[#allocation8] sm:$0xf]
    %v399 = vld [vmem:[#allocation8 + $0x4] sm:$0xf]
    %v400 = vld [vmem:[#allocation8 + $0x8] sm:$0xf]
    %v401 = vld [vmem:[#allocation8 + $0xc] sm:$0xf]
    %v402 = vld [vmem:[#allocation8 + $0x10] sm:$0xf]
    %v403 = vld [vmem:[#allocation8 + $0x14] sm:$0xf]
    %v404 = vld [vmem:[#allocation8 + $0x18] sm:$0xf]
    %v405 = vld [vmem:[#allocation8 + $0x1c] sm:$0xf]
    %v406 = vld [vmem:[#allocation8 + $0x20] sm:$0xf]
    %v407 = vld [vmem:[#allocation8 + $0x24] sm:$0xf]
    %v408 = vld [vmem:[#allocation8 + $0x28] sm:$0xf]
    %v409 = vld [vmem:[#allocation8 + $0x2c] sm:$0xf]
    %v410 = vld [vmem:[#allocation8 + $0x30] sm:$0xf]
    %v411 = vld [vmem:[#allocation8 + $0x34] sm:$0xf]
    %v412 = vld [vmem:[#allocation8 + $0x38] sm:$0xf]
    %v413 = vld [vmem:[#allocation8 + $0x3c] sm:$0xf]
    %v414 = vld [vmem:[#allocation8 + $0x40] sm:$0xf]
    %v415 = vld [vmem:[#allocation8 + $0x44] sm:$0xf]
    %v416 = vld [vmem:[#allocation8 + $0x48] sm:$0xf]
    %v417 = vld [vmem:[#allocation8 + $0x4c] sm:$0xf]
    %v418 = vld [vmem:[#allocation8 + $0x50] sm:$0xf]
    %v419 = vld [vmem:[#allocation8 + $0x54] sm:$0xf]
    %v420 = vld [vmem:[#allocation8 + $0x58] sm:$0xf]
    %v421 = vld [vmem:[#allocation8 + $0x5c] sm:$0xf]
    %v422 = vld [vmem:[#allocation8 + $0x60] sm:$0xf]
    %v423 = vld [vmem:[#allocation8 + $0x64] sm:$0xf]
    %v424 = vld [vmem:[#allocation8 + $0x68] sm:$0xf]
    %v425 = vld [vmem:[#allocation8 + $0x6c] sm:$0xf]
    %v426 = vld [vmem:[#allocation8 + $0x70] sm:$0xf]
    %v427 = vld [vmem:[#allocation8 + $0x74] sm:$0xf]
    %v428 = vld [vmem:[#allocation8 + $0x78] sm:$0xf]
    %v429 = vld [vmem:[#allocation8 + $0x7c] sm:$0xf]
    %v430 = vld [vmem:[%s4] sm:$0x1]
    %v432 = vperm.slane %v430, 0
    %v466 = vunpack.c.l.b16 %v398
    %v467 = vunpack.c.l.b16 %v399
    %v468 = vunpack.c.l.b16 %v400
    %v469 = vunpack.c.l.b16 %v401
    %v470 = vunpack.c.l.b16 %v402
    %v471 = vunpack.c.l.b16 %v403
    %v472 = vunpack.c.l.b16 %v404
    %v473 = vunpack.c.l.b16 %v405
    %v474 = vunpack.c.l.b16 %v406
    %v475 = vunpack.c.l.b16 %v407
    %v476 = vunpack.c.l.b16 %v408
    %v477 = vunpack.c.l.b16 %v409
    %v478 = vunpack.c.l.b16 %v410
    %v479 = vunpack.c.l.b16 %v411
    %v480 = vunpack.c.l.b16 %v412
    %v481 = vunpack.c.l.b16 %v413
    %v482 = vunpack.c.l.b16 %v414
    %v483 = vunpack.c.l.b16 %v415
    %v484 = vunpack.c.l.b16 %v416
    %v485 = vunpack.c.l.b16 %v417
    %v486 = vunpack.c.l.b16 %v418
    %v487 = vunpack.c.l.b16 %v419
    %v488 = vunpack.c.l.b16 %v420
    %v489 = vunpack.c.l.b16 %v421
    %v490 = vunpack.c.l.b16 %v422
    %v491 = vunpack.c.l.b16 %v423
    %v492 = vunpack.c.l.b16 %v424
    %v493 = vunpack.c.l.b16 %v425
    %v494 = vunpack.c.l.b16 %v426
    %v495 = vunpack.c.l.b16 %v427
    %v496 = vunpack.c.l.b16 %v428
    %v497 = vunpack.c.l.b16 %v429
    %v498 = vpack.c.b16 %v467, %v466
    %v499 = vpack.c.b16 %v469, %v468
    %v500 = vpack.c.b16 %v471, %v470
    %v501 = vpack.c.b16 %v473, %v472
    %v502 = vpack.c.b16 %v475, %v474
    %v503 = vpack.c.b16 %v477, %v476
    %v504 = vpack.c.b16 %v479, %v478
    %v505 = vpack.c.b16 %v481, %v480
    %v506 = vpack.c.b16 %v483, %v482
    %v507 = vpack.c.b16 %v485, %v484
    %v508 = vpack.c.b16 %v487, %v486
    %v509 = vpack.c.b16 %v489, %v488
    %v510 = vpack.c.b16 %v491, %v490
    %v511 = vpack.c.b16 %v493, %v492
    %v512 = vpack.c.b16 %v495, %v494
    %v513 = vpack.c.b16 %v497, %v496
    %530 = vmatpush.bf16.msra.mxu0 %v505
    %531 = vmatpush.bf16.msra.mxu0 %v504
    %532 = vmatpush.bf16.msra.mxu0 %v503
    %533 = vmatpush.bf16.msra.mxu0 %v502
    %534 = vmatpush.bf16.msra.mxu0 %v501
    %535 = vmatpush.bf16.msra.mxu0 %v500
    %536 = vmatpush.bf16.msra.mxu0 %v499
    %537 = vmatpush.bf16.msra.mxu0 %v498
    %538 = vmatmul.bf16.gmra.mxu0 %v396
    %v539 = vpop.f32.mrf.mxu0
    %v540 = vadd.f32 %v432, %v539
    %v541 = vpop.f32.mrf.mxu0
    %v542 = vadd.f32 %v432, %v541
    %543 = vdwg.mxu0
    %544 = vmatpush.bf16.msra.mxu0 %v513
    %545 = vmatpush.bf16.msra.mxu0 %v512
    %546 = vmatpush.bf16.msra.mxu0 %v511
    %547 = vmatpush.bf16.msra.mxu0 %v510
    %548 = vmatpush.bf16.msra.mxu0 %v509
    %549 = vmatpush.bf16.msra.mxu0 %v508
    %550 = vmatpush.bf16.msra.mxu0 %v507
    %551 = vmatpush.bf16.msra.mxu0 %v506
    %552 = vmatmul.bf16.gmra.mxu0 %v397
    %v553 = vpop.f32.mrf.mxu0
    %v554 = vadd.f32 %v540, %v553
    %v555 = vpop.f32.mrf.mxu0
    %v556 = vadd.f32 %v542, %v555
    %557 = vdwg.mxu0
    %558 = vst [vmem:[#allocation10] sm:$0xff] %v554
    %559 = vst [vmem:[#allocation10 + $0x8] sm:$0xff] %v556
    // Predicated region
    $region38: #{tpu_custom_call.1} parent=1 // pred_check
      _
    $region39: #{tpu_custom_call.1} parent=1 // pred_check_branch
      %561 = sbr.rel (0) target = $region41
    $region40: #{tpu_custom_call.1} parent=1 // pred_region
      %563 = vsyncadd [#allocation4], 0
      %s564 = sshll.u32 [#allocation10], 4
      %s565 = int_to_ptr.vmem [resolvable:$true] %s564
      %s566 = sshll.u32 %s5, 4
      %s567 = int_to_ptr.hbm [resolvable:$true] %s566
      %572 = dma.vmem_to_hbm [thread:$0]  %s565, 256, %s567, [#allocation4], 128, 128, 8
    $region41: #{tpu_custom_call.1} parent=1 // pred_fallthru
      _
    // Predicated region
    $region42: #{tpu_custom_call.1} parent=1 // pred_check
      _
    $region43: #{tpu_custom_call.1} parent=1 // pred_check_branch
      %574 = sbr.rel (0) target = $region45
    $region44: #{tpu_custom_call.1} parent=1 // pred_region
      %576 = dma.done [#allocation4], 256
    $region45: #{tpu_custom_call.1} parent=1 // pred_fallthru
      _
    %577 = vsyncpa [#allocation3], 1
    %578 = vsyncpa [#allocation6], 1
    %579 = vsyncpa [#allocation9], 1
    %580 = vsyncpa [#allocation4], 1

</llo_original>
